<compile_context>
chip_gen: v7x
topology: tpu7x:2x2x1
jax: 0.10.0
libtpu: 0.0.40
codegen_flags: <defaults>
</compile_context>

<pallas_src>
import jax
import jax.numpy as jnp
from jax import lax
from jax.experimental import pallas as pl
from jax.experimental.pallas import tpu as pltpu


_LANE = 128
_SUBLANE = 8


def _round_up(x, m):
    return ((x + m - 1) // m) * m


def _critic_kernel(obs_ref, act_ref, w1o_ref, w1a_ref, b1_ref, w2_ref, b2_ref, o_ref):
    # obs: (TB, Do)      act: (TB, Da)
    # w1o: (Do, H)       w1a: (Da, H)       b1: (1, H)
    # w2 : (8, H)   (row 0 = w2^T, rows 1..7 zero)
    # b2 : (1,) f32 scalar in SMEM
    # o  : (1, TB)  lane-dense output (batch on lanes)
    h = jnp.dot(obs_ref[...], w1o_ref[...], preferred_element_type=jnp.float32)
    h = h + jnp.dot(act_ref[...], w1a_ref[...], preferred_element_type=jnp.float32)
    h = jnp.maximum(h + b1_ref[...], 0.0)                       # ReLU, f32, VPU

    # Layer 2 (H -> 1): contract the hidden dim of w2 (8, H) and h (TB, H).
    # Result (8, TB) has the batch dim on lanes, so the store below is a dense
    # 128-lane store instead of a masked (TB, 1) column store.
    q8 = lax.dot_general(w2_ref[...], h, (((1,), (1,)), ((), ())),
                         preferred_element_type=jnp.float32)    # (8, TB); row 0 = q
    o_ref[...] = (q8[0:1, :] + b2_ref[0]).astype(o_ref.dtype)


def prepare_params(params, full_obs_dim, dtype=jnp.float32):
    """One-time, host/wrapper-side weight preprocessing.

    params = (w1 (in_dim, H), b1 (H,), w2 (H, 1), b2 (1,))  [x @ w1 layout].
    Returns (w1_obs, w1_acts, b1 (1, Hp), w2 (8, Hp), b2 (1,)) with the hidden
    dim zero-padded to a multiple of 128 (numerically exact: padded units give
    ReLU(0) = 0 and hit zero w2 entries).  `dtype` applies to the layer-1
    weights only (use bf16 if obs/acts already arrive in bf16 upstream);
    layer-2 weight and biases stay f32 (they meet the f32 accumulator).
    """
    w1, b1, w2, b2 = params
    in_dim, hidden = w1.shape
    hp = _round_up(hidden, _LANE)
    pad_h = hp - hidden
    w1_obs = jnp.pad(w1[:full_obs_dim], ((0, 0), (0, pad_h))).astype(dtype)
    w1_act = jnp.pad(w1[full_obs_dim:], ((0, 0), (0, pad_h))).astype(dtype)
    b1p = jnp.pad(b1.reshape(1, hidden), ((0, 0), (0, pad_h))).astype(jnp.float32)
    # (8, Hp) slab: row 0 is w2^T, rows 1..7 zero -> tiling/MXU friendly lhs for
    # the lane-dense layer-2 contraction.
    w2p = jnp.pad(w2.reshape(hidden, 1).T, ((0, 7), (0, pad_h))).astype(jnp.float32)
    b2p = b2.reshape((1,)).astype(jnp.float32)
    return w1_obs, w1_act, b1p, w2p, b2p


def _batch_tiling(batch, block_batch):
    """Pick (rows-per-tile, grid steps).

    Small batches: one sublane-aligned tile.  Larger batches: tiles that are
    multiples of 128 rows (so the (1, TB) output blocks are unmasked, lane-dense
    stores) and an even number of grid steps where possible so the "parallel"
    batch axis splits evenly across the two v7x TensorCores.
    """
    block_batch = max(_LANE, _round_up(block_batch, _LANE))
    if batch <= 2 * _LANE:
        return _round_up(batch, _SUBLANE), 1
    if batch <= 2 * block_batch:
        tb = _round_up(pl.cdiv(batch, 2), _LANE)
        return tb, pl.cdiv(batch, tb)
    tb = block_batch
    steps = pl.cdiv(batch, tb)
    if steps % 2:                       # balance across the two v7x TensorCores
        steps += 1
        tb = max(_LANE, _round_up(pl.cdiv(batch, steps), _LANE))
        steps = pl.cdiv(batch, tb)
    return tb, steps


def maddpg_critic_forward(full_obs, full_acts, prepared_params, *, block_batch=4096):
    """full_obs: (B, obs_dim), full_acts: (B, act_dim) -> (B, 1) float32."""
    w1o, w1a, b1, w2, b2 = prepared_params
    B, obs_dim = full_obs.shape
    _, act_dim = full_acts.shape
    H = w1o.shape[1]

    # Per-row VMEM cost with the lane-padded footprint: obs/acts tiles padded to
    # 128 lanes, double-buffered; h (TB, H) f32 plus temporaries; small (8, TB)
    # layer-2 / (1, TB) output slabs.
    in_itemsize = jnp.dtype(full_obs.dtype).itemsize
    per_row_bytes = (
        2 * (_round_up(obs_dim, _LANE) + _round_up(act_dim, _LANE)) * in_itemsize
        + 2 * H * 4
        + 128
    )
    rows_cap = max(_LANE, ((36 << 20) // per_row_bytes // _LANE) * _LANE)
    tb, grid_n = _batch_tiling(B, min(block_batch, rows_cap))
    b_pad = tb * grid_n
    vmem_limit = int(min(max(tb * per_row_bytes + (1 << 20), 16 << 20), 48 << 20))

    flops = 2 * B * (obs_dim + act_dim) * H + 2 * B * H * 8 + 2 * B * H
    bytes_accessed = (
        full_obs.size * in_itemsize + full_acts.size * in_itemsize
        + (w1o.size + w1a.size) * jnp.dtype(w1o.dtype).itemsize
        + (b1.size + w2.size + b2.size) * 4
        + B * 4
    )

    out = pl.pallas_call(
        _critic_kernel,
        out_shape=jax.ShapeDtypeStruct((1, b_pad), jnp.float32),
        grid=(grid_n,),
        in_specs=[
            pl.BlockSpec((tb, obs_dim), lambda i: (i, 0)),        # obs tile
            pl.BlockSpec((tb, act_dim), lambda i: (i, 0)),        # acts tile
            pl.BlockSpec((obs_dim, H), lambda i: (0, 0)),         # w1_obs (resident)
            pl.BlockSpec((act_dim, H), lambda i: (0, 0)),         # w1_acts (resident)
            pl.BlockSpec((1, H), lambda i: (0, 0)),               # b1 (resident)
            pl.BlockSpec((8, H), lambda i: (0, 0)),               # w2 slab (resident)
            pl.BlockSpec(memory_space=pltpu.MemorySpace.SMEM),    # b2 scalar
        ],
        out_specs=pl.BlockSpec((1, tb), lambda i: (0, i)),        # lane-dense output
        compiler_params=pltpu.CompilerParams(
            dimension_semantics=("parallel",),
            vmem_limit_bytes=vmem_limit,
        ),
        cost_estimate=pl.CostEstimate(
            flops=int(flops), transcendentals=0, bytes_accessed=int(bytes_accessed)),
    )(full_obs, full_acts, w1o, w1a, b1, w2, b2)

    # (1, b_pad) lane-dense slab -> (B, 1); tiny slice + contiguous reshape.
    return out[0, :B].reshape(B, 1)


def init_params(key, full_obs_dim, full_act_dim, hidden=64):
    """Deterministic init matching PyTorch nn.Linear default (U[-1/sqrt(fan_in), +])."""
    in_dim = full_obs_dim + full_act_dim
    k1, k2, k3, k4 = jax.random.split(key, 4)
    bound1 = 1.0 / jnp.sqrt(in_dim)
    bound2 = 1.0 / jnp.sqrt(hidden)
    w1 = jax.random.uniform(k1, (in_dim, hidden), jnp.float32, -bound1, bound1)
    b1 = jax.random.uniform(k2, (hidden,), jnp.float32, -bound1, bound1)
    w2 = jax.random.uniform(k3, (hidden, 1), jnp.float32, -bound2, bound2)
    b2 = jax.random.uniform(k4, (1,), jnp.float32, -bound2, bound2)
    return w1, b1, w2, b2


def _reference(params, full_obs, full_acts):
    w1, b1, w2, b2 = params
    x = jnp.concatenate([full_obs, full_acts], axis=-1)
    return jnp.maximum(x @ w1 + b1, 0.0) @ w2 + b2


if __name__ == "__main__":
    key = jax.random.PRNGKey(0)
    k_obs, k_act, k_par = jax.random.split(key, 3)

    full_obs_dim = 16   # e.g. 2 agents x 8-dim obs
    full_act_dim = 8    # e.g. 2 agents x 4-dim action

    params = init_params(k_par, full_obs_dim, full_act_dim)
    prepared = prepare_params(params, full_obs_dim)

    fwd = jax.jit(maddpg_critic_forward, static_argnames=("block_batch",))

    # Small batch: single partial tile (rows 2..7 of the tile are out-of-bounds
    # garbage, sliced off after the call).
    batch = 2
    full_obs = jax.random.normal(k_obs, (batch, full_obs_dim), jnp.float32)
    full_acts = jax.random.normal(k_act, (batch, full_act_dim), jnp.float32)
    q = jax.block_until_ready(fwd(full_obs, full_acts, prepared))
    q_ref = _reference(params, full_obs, full_acts)
    assert q.shape == (batch, 1)
    assert jnp.allclose(q, q_ref, atol=1e-5, rtol=1e-5)

    # Multi-tile path: 2 parallel grid steps, ragged last tile, lane-dense store.
    batch2 = 300
    obs2 = jax.random.normal(jax.random.PRNGKey(1), (batch2, full_obs_dim), jnp.float32)
    acts2 = jax.random.normal(jax.random.PRNGKey(2), (batch2, full_act_dim), jnp.float32)
    q2 = jax.block_until_ready(fwd(obs2, acts2, prepared))
    q2_ref = _reference(params, obs2, acts2)
    assert q2.shape == (batch2, 1)
    assert jnp.allclose(q2, q2_ref, atol=1e-4, rtol=1e-4)

    print("KERNEL_OK")
</pallas_src>

<mosaic_0001>
module attributes {stable_mosaic.version = 11 : i64} {
  func.func @_critic_kernel(%arg0: i32, %arg1: memref<8x16xf32, #tpu.memory_space<vmem>>, %arg2: memref<8x8xf32, #tpu.memory_space<vmem>>, %arg3: memref<16x128xf32, #tpu.memory_space<vmem>>, %arg4: memref<8x128xf32, #tpu.memory_space<vmem>>, %arg5: memref<1x128xf32, #tpu.memory_space<vmem>>, %arg6: memref<8x128xf32, #tpu.memory_space<vmem>>, %arg7: memref<1xf32, #tpu.memory_space<smem>>, %arg8: memref<1x8xf32, #tpu.memory_space<vmem>>) attributes {dimension_semantics = [#tpu.dimension_semantics<parallel>], iteration_bounds = array<i64: 1>, scalar_prefetch = 0 : i64, scratch_operands = 0 : i64, tpu.core_type = #tpu.core_type<tc>, window_params = [{transform_indices = @transform_0, window_bounds = array<i64: 8, 16>}, {transform_indices = @transform_1, window_bounds = array<i64: 8, 8>}, {pipeline_mode = #tpu.pipeline_mode<synchronous>, transform_indices = @transform_2, window_bounds = array<i64: 16, 128>}, {pipeline_mode = #tpu.pipeline_mode<synchronous>, transform_indices = @transform_3, window_bounds = array<i64: 8, 128>}, {pipeline_mode = #tpu.pipeline_mode<synchronous>, transform_indices = @transform_4, window_bounds = array<i64: 1, 128>}, {pipeline_mode = #tpu.pipeline_mode<synchronous>, transform_indices = @transform_5, window_bounds = array<i64: 8, 128>}, {transform_indices = @transform_6, window_bounds = array<i64: 1>}, {transform_indices = @transform_7, window_bounds = array<i64: 1, 8>}]} {
    %c0 = arith.constant 0 : index
    %c0_0 = arith.constant 0 : index
    %0 = vector.load %arg1[%c0, %c0_0] : memref<8x16xf32, #tpu.memory_space<vmem>>, vector<8x16xf32>
    %c0_1 = arith.constant 0 : index
    %c0_2 = arith.constant 0 : index
    %1 = vector.load %arg3[%c0_1, %c0_2] : memref<16x128xf32, #tpu.memory_space<vmem>>, vector<16x128xf32>
    %cst = arith.constant dense<0.000000e+00> : vector<8x128xf32>
    %2 = tpu.matmul %0, %1, %cst {dimension_numbers = #tpu.dot_dimension_numbers<[1], [0], [0], [1], [0, 0, 1, 1], [], []>} : vector<8x16xf32>, vector<16x128xf32>, vector<8x128xf32> -> vector<8x128xf32>
    %c0_3 = arith.constant 0 : index
    %c0_4 = arith.constant 0 : index
    %3 = vector.load %arg2[%c0_3, %c0_4] : memref<8x8xf32, #tpu.memory_space<vmem>>, vector<8x8xf32>
    %c0_5 = arith.constant 0 : index
    %c0_6 = arith.constant 0 : index
    %4 = vector.load %arg4[%c0_5, %c0_6] : memref<8x128xf32, #tpu.memory_space<vmem>>, vector<8x128xf32>
    %cst_7 = arith.constant dense<0.000000e+00> : vector<8x128xf32>
    %5 = tpu.matmul %3, %4, %cst_7 {dimension_numbers = #tpu.dot_dimension_numbers<[1], [0], [0], [1], [0, 0, 1, 1], [], []>} : vector<8x8xf32>, vector<8x128xf32>, vector<8x128xf32> -> vector<8x128xf32>
    %6 = arith.addf %2, %5 : vector<8x128xf32>
    %c0_8 = arith.constant 0 : index
    %c0_9 = arith.constant 0 : index
    %7 = vector.load %arg5[%c0_8, %c0_9] : memref<1x128xf32, #tpu.memory_space<vmem>>, vector<1x128xf32>
    %8 = vector.broadcast %7 : vector<1x128xf32> to vector<8x128xf32>
    %9 = arith.addf %6, %8 : vector<8x128xf32>
    %cst_10 = arith.constant 0.000000e+00 : f32
    %10 = vector.broadcast %cst_10 : f32 to vector<8x128xf32>
    %11 = arith.maximumf %9, %10 : vector<8x128xf32>
    %c0_11 = arith.constant 0 : index
    %c0_12 = arith.constant 0 : index
    %12 = vector.load %arg6[%c0_11, %c0_12] : memref<8x128xf32, #tpu.memory_space<vmem>>, vector<8x128xf32>
    %cst_13 = arith.constant dense<0.000000e+00> : vector<8x8xf32>
    %13 = tpu.matmul %12, %11, %cst_13 {dimension_numbers = #tpu.dot_dimension_numbers<[1], [1], [0], [0], [0, 0, 1, 0], [], []>} : vector<8x128xf32>, vector<8x128xf32>, vector<8x8xf32> -> vector<8x8xf32>
    %14 = vector.extract_strided_slice %13 {offsets = [0, 0], sizes = [1, 8], strides = [1, 1]} : vector<8x8xf32> to vector<1x8xf32>
    %c0_14 = arith.constant 0 : index
    %15 = memref.load %arg7[%c0_14] : memref<1xf32, #tpu.memory_space<smem>>
    %16 = vector.broadcast %15 : f32 to vector<1x8xf32>
    %17 = arith.addf %14, %16 : vector<1x8xf32>
    %c0_15 = arith.constant 0 : index
    %c0_16 = arith.constant 0 : index
    %18 = vector.load %arg8[%c0_15, %c0_16] : memref<1x8xf32, #tpu.memory_space<vmem>>, vector<1x8xf32>
    tpu.vector_store %arg8[%c0_15, %c0_16], %17 {strides = array<i32>} : memref<1x8xf32, #tpu.memory_space<vmem>>, vector<1x8xf32>,
    return
  }
  func.func @transform_0(%arg0: i32) -> (i32, i32) {
    %c0_i32 = arith.constant 0 : i32
    %c0_i32_0 = arith.constant 0 : i32
    return %arg0, %c0_i32 : i32, i32
  }
  func.func @transform_1(%arg0: i32) -> (i32, i32) {
    %c0_i32 = arith.constant 0 : i32
    %c0_i32_0 = arith.constant 0 : i32
    return %arg0, %c0_i32 : i32, i32
  }
  func.func @transform_2(%arg0: i32) -> (i32, i32) {
    %c0_i32 = arith.constant 0 : i32
    %c0_i32_0 = arith.constant 0 : i32
    %c0_i32_1 = arith.constant 0 : i32
    return %c0_i32, %c0_i32_0 : i32, i32
  }
  func.func @transform_3(%arg0: i32) -> (i32, i32) {
    %c0_i32 = arith.constant 0 : i32
    %c0_i32_0 = arith.constant 0 : i32
    %c0_i32_1 = arith.constant 0 : i32
    return %c0_i32, %c0_i32_0 : i32, i32
  }
  func.func @transform_4(%arg0: i32) -> (i32, i32) {
    %c0_i32 = arith.constant 0 : i32
    %c0_i32_0 = arith.constant 0 : i32
    %c0_i32_1 = arith.constant 0 : i32
    return %c0_i32, %c0_i32_0 : i32, i32
  }
  func.func @transform_5(%arg0: i32) -> (i32, i32) {
    %c0_i32 = arith.constant 0 : i32
    %c0_i32_0 = arith.constant 0 : i32
    %c0_i32_1 = arith.constant 0 : i32
    return %c0_i32, %c0_i32_0 : i32, i32
  }
  func.func @transform_6(%arg0: i32) -> i32 {
    %c0_i32 = arith.constant 0 : i32
    %c0_i32_0 = arith.constant 0 : i32
    return %c0_i32 : i32
  }
  func.func @transform_7(%arg0: i32) -> (i32, i32) {
    %c0_i32 = arith.constant 0 : i32
    %c0_i32_0 = arith.constant 0 : i32
    return %c0_i32, %arg0 : i32, i32
  }
}

</mosaic_0001>

<llo_original>
// kernel: maddpg_critic_forward.1
$region0: #{maddpg_critic_forward.1}
  #allocation0 [shape = 'u32[]', space=smem, size = 0x4, offset = 0x4, fixed_abs, tag = 'smem constant byte address 0x4 - core index']
  #allocation1 [shape = 'u32[144,128]{1,0:T(1,128)}', space=vmem, size = 0x12000, scoped, tag = 'internal scratch']
  #allocation2 [shape = 'f32[1]{0:T(128)S(6)}', space=smem, size = 0x200, scoped, tag = 'scoped memory for maddpg_critic_forward.1']
  %s0 = inlined_call_operand.vmem [shape: f32[2,16], index: 0, kind: input, shape index: {}]
  %s1 = inlined_call_operand.hbm [shape: f32[2,8], index: 1, kind: input, shape index: {}]
  %s2 = inlined_call_operand.hbm [shape: f32[16,128], index: 2, kind: input, shape index: {}]
  %s3 = inlined_call_operand.vmem [shape: f32[8,128], index: 3, kind: input, shape index: {}]
  %s4 = inlined_call_operand.hbm [shape: f32[1,128], index: 4, kind: input, shape index: {}]
  %s5 = inlined_call_operand.vmem [shape: f32[8,128], index: 5, kind: input, shape index: {}]
  %s6 = inlined_call_operand.<no memory space> [shape: f32[1], index: 6, kind: input, shape index: {}]
  %s7 = inlined_call_operand.vmem [shape: f32[1,8], index: 7, kind: output, shape index: {}]
  %s8 = sld [smem:[#allocation0]]
  $region50: #{maddpg_critic_forward.1} parent=0
    _
  %s10 = ssub.s32 1, %s8
  %s11 = scalar_select 0, %s10, %s8
  %12 = sst [smem:[#allocation2]] %s6
  $region1: #{maddpg_critic_forward.1} parent=0
    #allocation3 [shape = 'u8[4096]{0}', space=vmem, size = 0x1000, scoped, tag = 'input window, operand 1, single buffered']
    #allocation4 [shape = 's32[1]{0}', space=sflag, size = 0x4, scoped, tag = 'scoped memory for maddpg_critic_forward.1']
    #allocation5 [shape = 'u8[8192]{0}', space=vmem, size = 0x2000, scoped, tag = 'input window, operand 2, single buffered']
    #allocation6 [shape = 's32[1]{0}', space=sflag, size = 0x4, scoped, tag = 'scoped memory for maddpg_critic_forward.1']
    #allocation7 [shape = 'u8[512]{0}', space=vmem, size = 0x400, scoped, tag = 'input window, operand 4, single buffered']
    %13 = vsyncpa [#allocation4], 0
    %14 = vsyncpa [#allocation6], 0
    // Predicated region
    $region2: #{maddpg_critic_forward.1} parent=1 // pred_check
      _
    $region3: #{maddpg_critic_forward.1} parent=1 // pred_check_branch
      %16 = sbr.rel (0) target = $region5
    $region4: #{maddpg_critic_forward.1} parent=1 // pred_region
      _
    $region5: #{maddpg_critic_forward.1} parent=1 // pred_fallthru
      _
    // Predicated region
    $region6: #{maddpg_critic_forward.1} parent=1 // pred_check
      _
    $region7: #{maddpg_critic_forward.1} parent=1 // pred_check_branch
      %18 = sbr.rel (0) target = $region9
    $region8: #{maddpg_critic_forward.1} parent=1 // pred_region
      %s20 = ssub.s32 128, 32
      %21 = vsyncadd [#allocation4], %s20
      %s22 = sshll.u32 [#allocation3], 4
      %s23 = int_to_ptr.vmem [resolvable:$true] %s22
      %28 = dma.hbm_to_vmem [thread:$0]  %s1, 32, %s23, [#allocation4], 32, 32, 2
    $region9: #{maddpg_critic_forward.1} parent=1 // pred_fallthru
      _
    // Predicated region
    $region10: #{maddpg_critic_forward.1} parent=1 // pred_check
      _
    $region11: #{maddpg_critic_forward.1} parent=1 // pred_check_branch
      %30 = sbr.rel (0) target = $region13
    $region12: #{maddpg_critic_forward.1} parent=1 // pred_region
      %s32 = ssub.s32 256, 256
      %33 = vsyncadd [#allocation6], %s32
      %s34 = sshll.u32 [#allocation5], 4
      %s35 = int_to_ptr.vmem [resolvable:$true] %s34
      %40 = dma.hbm_to_vmem [thread:$0]  %s2, 256, %s35, [#allocation6], 128, 128, 8
    $region13: #{maddpg_critic_forward.1} parent=1 // pred_fallthru
      _
    // Predicated region
    $region14: #{maddpg_critic_forward.1} parent=1 // pred_check
      _
    $region15: #{maddpg_critic_forward.1} parent=1 // pred_check_branch
      %42 = sbr.rel (0) target = $region17
    $region16: #{maddpg_critic_forward.1} parent=1 // pred_region
      _
    $region17: #{maddpg_critic_forward.1} parent=1 // pred_fallthru
      _
    // Predicated region
    $region18: #{maddpg_critic_forward.1} parent=1 // pred_check
      _
    $region19: #{maddpg_critic_forward.1} parent=1 // pred_check_branch
      %44 = sbr.rel (0) target = $region21
    $region20: #{maddpg_critic_forward.1} parent=1 // pred_region
      %s46 = ssub.s32 16, 16
      %47 = vsyncadd [#allocation6], %s46
      %s49 = sshll.u32 [#allocation7], 4
      %s50 = int_to_ptr.vmem [resolvable:$true] %s49
      %52 = dma.hbm_to_vmem [thread:$0]  %s4, 16, %s50, [#allocation6]
    $region21: #{maddpg_critic_forward.1} parent=1 // pred_fallthru
      _
    // Predicated region
    $region22: #{maddpg_critic_forward.1} parent=1 // pred_check
      _
    $region23: #{maddpg_critic_forward.1} parent=1 // pred_check_branch
      %54 = sbr.rel (0) target = $region25
    $region24: #{maddpg_critic_forward.1} parent=1 // pred_region
      _
    $region25: #{maddpg_critic_forward.1} parent=1 // pred_fallthru
      _
    // Predicated region
    $region26: #{maddpg_critic_forward.1} parent=1 // pred_check
      _
    $region27: #{maddpg_critic_forward.1} parent=1 // pred_check_branch
      %56 = sbr.rel (0) target = $region29
    $region28: #{maddpg_critic_forward.1} parent=1 // pred_region
      _
    $region29: #{maddpg_critic_forward.1} parent=1 // pred_fallthru
      _
    // Predicated region
    $region30: #{maddpg_critic_forward.1} parent=1 // pred_check
      _
    $region31: #{maddpg_critic_forward.1} parent=1 // pred_check_branch
      %58 = sbr.rel (0) target = $region33
    $region32: #{maddpg_critic_forward.1} parent=1 // pred_region
      %59 = dma.done [#allocation4], 128
    $region33: #{maddpg_critic_forward.1} parent=1 // pred_fallthru
      _
    // Predicated region
    $region34: #{maddpg_critic_forward.1} parent=1 // pred_check
      _
    $region35: #{maddpg_critic_forward.1} parent=1 // pred_check_branch
      %61 = sbr.rel (0) target = $region37
    $region36: #{maddpg_critic_forward.1} parent=1 // pred_region
      %62 = dma.done [#allocation6], 256
    $region37: #{maddpg_critic_forward.1} parent=1 // pred_fallthru
      _
    // Predicated region
    $region38: #{maddpg_critic_forward.1} parent=1 // pred_check
      _
    $region39: #{maddpg_critic_forward.1} parent=1 // pred_check_branch
      %64 = sbr.rel (0) target = $region41
    $region40: #{maddpg_critic_forward.1} parent=1 // pred_region
      %65 = dma.done [#allocation6], 16
    $region41: #{maddpg_critic_forward.1} parent=1 // pred_fallthru
      _
    %v66 = vld [vmem:[%s0] sm:$0xff]
    %v67 = vld [vmem:[#allocation5] sm:$0xff]
    %v68 = vld [vmem:[#allocation5 + $0x8] sm:$0xff]
    %v69 = vld [vmem:[#allocation3] sm:$0xff]
    %v70 = vld [vmem:[%s3] sm:$0xff]
    %vm71 = vcmask 64512
    %v73 = vsel %vm71, %v69, 0
    %75 = vmatprep.subr.mxu0 0.0
    %76 = vmatpush1.msra.mxu0 %v70
    %77 = vmatprep.subr.mxu0 0.0
    %78 = vmatpush1.msra.mxu0 0.0
    %79 = vmatprep.subr.mxu0 0.0
    %80 = vmatpush1.msra.mxu0 0.0
    %81 = vmatprep.subr.mxu0 0.0
    %82 = vmatpush1.msra.mxu0 0.0
    %83 = vmatprep.subr.mxu0 0.0
    %84 = vmatpush1.msra.mxu0 0.0
    %85 = vmatprep.subr.mxu0 0.0
    %86 = vmatpush1.msra.mxu0 0.0
    %87 = vmatprep.subr.mxu0 0.0
    %88 = vmatpush1.msra.mxu0 0.0
    %89 = vmatprep.subr.mxu0 0.0
    %90 = vmatpush1.msra.mxu0 0.0
    %91 = vmatprep.subr.mxu0 0.0
    %92 = vmatpush1.msra.mxu0 0.0
    %93 = vmatprep.subr.mxu0 0.0
    %94 = vmatpush1.msra.mxu0 0.0
    %95 = vmatprep.subr.mxu0 0.0
    %96 = vmatpush1.msra.mxu0 0.0
    %97 = vmatprep.subr.mxu0 0.0
    %98 = vmatpush1.msra.mxu0 0.0
    %99 = vmatprep.subr.mxu0 0.0
    %100 = vmatpush1.msra.mxu0 0.0
    %101 = vmatprep.subr.mxu0 0.0
    %102 = vmatpush1.msra.mxu0 0.0
    %103 = vmatprep.subr.mxu0 0.0
    %104 = vmatpush1.msra.mxu0 0.0
    %105 = vmatprep.subr.mxu0 0.0
    %106 = vmatpush1.msra.mxu0 0.0
    %107 = vmatprep.subr.mxu0 0.0
    %108 = vmatpush1.msra.mxu0 0.0
    %109 = vmatprep.subr.mxu0 0.0
    %110 = vmatpush1.msra.mxu0 0.0
    %111 = vmatprep.subr.mxu0 0.0
    %112 = vmatpush1.msra.mxu0 0.0
    %113 = vmatprep.subr.mxu0 0.0
    %114 = vmatpush1.msra.mxu0 0.0
    %115 = vmatprep.subr.mxu0 0.0
    %116 = vmatpush1.msra.mxu0 0.0
    %117 = vmatprep.subr.mxu0 0.0
    %118 = vmatpush1.msra.mxu0 0.0
    %119 = vmatprep.subr.mxu0 0.0
    %120 = vmatpush1.msra.mxu0 0.0
    %121 = vmatprep.subr.mxu0 0.0
    %122 = vmatpush1.msra.mxu0 0.0
    %123 = vmatprep.subr.mxu0 0.0
    %124 = vmatpush1.msra.mxu0 0.0
    %125 = vmatprep.subr.mxu0 0.0
    %126 = vmatpush1.msra.mxu0 0.0
    %127 = vmatprep.subr.mxu0 0.0
    %128 = vmatpush1.msra.mxu0 0.0
    %129 = vmatprep.subr.mxu0 0.0
    %130 = vmatpush1.msra.mxu0 0.0
    %131 = vmatprep.subr.mxu0 0.0
    %132 = vmatpush1.msra.mxu0 0.0
    %133 = vmatprep.subr.mxu0 0.0
    %134 = vmatpush1.msra.mxu0 0.0
    %135 = vmatprep.subr.mxu0 0.0
    %136 = vmatpush1.msra.mxu0 0.0
    %137 = vmatprep.subr.mxu0 0.0
    %138 = vmatpush1.msra.mxu0 0.0
    %139 = vmatprep.mubr.f32.mxu0 0.0
    %140 = vmatmul.mubr.f32.gmra.mrb[0].mxu0 %v73
    %v141 = vpop.f32.mrb[0].mxu0
    %v142 = vadd.f32 0.0, %v141
    %v143 = vpop.f32.mrb[0].mxu0
    %144 = vdwg.mxu0
    %vm145 = vcmask 130048
    %v147 = vsel %vm145, %v66, 0
    %149 = vmatprep.subr.mxu0 0.0
    %150 = vmatpush1.msra.mxu0 %v67
    %151 = vmatprep.subr.mxu0 0.0
    %152 = vmatpush1.msra.mxu0 %v68
    %153 = vmatprep.subr.mxu0 0.0
    %154 = vmatpush1.msra.mxu0 0.0
    %155 = vmatprep.subr.mxu0 0.0
    %156 = vmatpush1.msra.mxu0 0.0
    %157 = vmatprep.subr.mxu0 0.0
    %158 = vmatpush1.msra.mxu0 0.0
    %159 = vmatprep.subr.mxu0 0.0
    %160 = vmatpush1.msra.mxu0 0.0
    %161 = vmatprep.subr.mxu0 0.0
    %162 = vmatpush1.msra.mxu0 0.0
    %163 = vmatprep.subr.mxu0 0.0
    %164 = vmatpush1.msra.mxu0 0.0
    %165 = vmatprep.subr.mxu0 0.0
    %166 = vmatpush1.msra.mxu0 0.0
    %167 = vmatprep.subr.mxu0 0.0
    %168 = vmatpush1.msra.mxu0 0.0
    %169 = vmatprep.subr.mxu0 0.0
    %170 = vmatpush1.msra.mxu0 0.0
    %171 = vmatprep.subr.mxu0 0.0
    %172 = vmatpush1.msra.mxu0 0.0
    %173 = vmatprep.subr.mxu0 0.0
    %174 = vmatpush1.msra.mxu0 0.0
    %175 = vmatprep.subr.mxu0 0.0
    %176 = vmatpush1.msra.mxu0 0.0
    %177 = vmatprep.subr.mxu0 0.0
    %178 = vmatpush1.msra.mxu0 0.0
    %179 = vmatprep.subr.mxu0 0.0
    %180 = vmatpush1.msra.mxu0 0.0
    %181 = vmatprep.subr.mxu0 0.0
    %182 = vmatpush1.msra.mxu0 0.0
    %183 = vmatprep.subr.mxu0 0.0
    %184 = vmatpush1.msra.mxu0 0.0
    %185 = vmatprep.subr.mxu0 0.0
    %186 = vmatpush1.msra.mxu0 0.0
    %187 = vmatprep.subr.mxu0 0.0
    %188 = vmatpush1.msra.mxu0 0.0
    %189 = vmatprep.subr.mxu0 0.0
    %190 = vmatpush1.msra.mxu0 0.0
    %191 = vmatprep.subr.mxu0 0.0
    %192 = vmatpush1.msra.mxu0 0.0
    %193 = vmatprep.subr.mxu0 0.0
    %194 = vmatpush1.msra.mxu0 0.0
    %195 = vmatprep.subr.mxu0 0.0
    %196 = vmatpush1.msra.mxu0 0.0
    %197 = vmatprep.subr.mxu0 0.0
    %198 = vmatpush1.msra.mxu0 0.0
    %199 = vmatprep.subr.mxu0 0.0
    %200 = vmatpush1.msra.mxu0 0.0
    %201 = vmatprep.subr.mxu0 0.0
    %202 = vmatpush1.msra.mxu0 0.0
    %203 = vmatprep.subr.mxu0 0.0
    %204 = vmatpush1.msra.mxu0 0.0
    %205 = vmatprep.subr.mxu0 0.0
    %206 = vmatpush1.msra.mxu0 0.0
    %207 = vmatprep.subr.mxu0 0.0
    %208 = vmatpush1.msra.mxu0 0.0
    %209 = vmatprep.subr.mxu0 0.0
    %210 = vmatpush1.msra.mxu0 0.0
    %211 = vmatprep.subr.mxu0 0.0
    %212 = vmatpush1.msra.mxu0 0.0
    %213 = vmatprep.mubr.f32.mxu0 0.0
    %214 = vmatmul.mubr.f32.gmra.mrb[0].mxu0 %v147
    %v215 = vpop.f32.mrb[0].mxu0
    %v216 = vadd.f32 %v142, %v215
    %v217 = vpop.f32.mrb[0].mxu0
    %218 = vdwg.mxu0
    %v219 = vld [vmem:[#allocation7] sm:$0x1]
    %v221 = vlaneseq
    %v222 = vshrl.u32 %v221, 7
    %v223 = vsub.s32 0, %v222
    %v224 = vrot.slane %v219, %v223
    %v226 = vadd.f32 %v216, %v224
    %v227 = vmax.f32 %v226, 0.0
    %v228 = vld [vmem:[%s5] sm:$0xff]
    %229 = vmatprep.subr.mxu0 0.0
    %230 = vmatpush1.xpose.msra.mxu0 %v227
    %231 = vmatprep.subr.mxu0 0.0
    %232 = vmatpush1.xpose.msra.mxu0 0.0
    %233 = vmatprep.subr.mxu0 0.0
    %234 = vmatpush1.xpose.msra.mxu0 0.0
    %235 = vmatprep.subr.mxu0 0.0
    %236 = vmatpush1.xpose.msra.mxu0 0.0
    %237 = vmatprep.subr.mxu0 0.0
    %238 = vmatpush1.xpose.msra.mxu0 0.0
    %239 = vmatprep.subr.mxu0 0.0
    %240 = vmatpush1.xpose.msra.mxu0 0.0
    %241 = vmatprep.subr.mxu0 0.0
    %242 = vmatpush1.xpose.msra.mxu0 0.0
    %243 = vmatprep.subr.mxu0 0.0
    %244 = vmatpush1.xpose.msra.mxu0 0.0
    %245 = vmatprep.subr.mxu0 0.0
    %246 = vmatpush1.xpose.msra.mxu0 0.0
    %247 = vmatprep.subr.mxu0 0.0
    %248 = vmatpush1.xpose.msra.mxu0 0.0
    %249 = vmatprep.subr.mxu0 0.0
    %250 = vmatpush1.xpose.msra.mxu0 0.0
    %251 = vmatprep.subr.mxu0 0.0
    %252 = vmatpush1.xpose.msra.mxu0 0.0
    %253 = vmatprep.subr.mxu0 0.0
    %254 = vmatpush1.xpose.msra.mxu0 0.0
    %255 = vmatprep.subr.mxu0 0.0
    %256 = vmatpush1.xpose.msra.mxu0 0.0
    %257 = vmatprep.subr.mxu0 0.0
    %258 = vmatpush1.xpose.msra.mxu0 0.0
    %259 = vmatprep.subr.mxu0 0.0
    %260 = vmatpush1.xpose.msra.mxu0 0.0
    %261 = vmatprep.subr.mxu0 0.0
    %262 = vmatpush1.xpose.msra.mxu0 0.0
    %263 = vmatprep.subr.mxu0 0.0
    %264 = vmatpush1.xpose.msra.mxu0 0.0
    %265 = vmatprep.subr.mxu0 0.0
    %266 = vmatpush1.xpose.msra.mxu0 0.0
    %267 = vmatprep.subr.mxu0 0.0
    %268 = vmatpush1.xpose.msra.mxu0 0.0
    %269 = vmatprep.subr.mxu0 0.0
    %270 = vmatpush1.xpose.msra.mxu0 0.0
    %271 = vmatprep.subr.mxu0 0.0
    %272 = vmatpush1.xpose.msra.mxu0 0.0
    %273 = vmatprep.subr.mxu0 0.0
    %274 = vmatpush1.xpose.msra.mxu0 0.0
    %275 = vmatprep.subr.mxu0 0.0
    %276 = vmatpush1.xpose.msra.mxu0 0.0
    %277 = vmatprep.subr.mxu0 0.0
    %278 = vmatpush1.xpose.msra.mxu0 0.0
    %279 = vmatprep.subr.mxu0 0.0
    %280 = vmatpush1.xpose.msra.mxu0 0.0
    %281 = vmatprep.subr.mxu0 0.0
    %282 = vmatpush1.xpose.msra.mxu0 0.0
    %283 = vmatprep.subr.mxu0 0.0
    %284 = vmatpush1.xpose.msra.mxu0 0.0
    %285 = vmatprep.subr.mxu0 0.0
    %286 = vmatpush1.xpose.msra.mxu0 0.0
    %287 = vmatprep.subr.mxu0 0.0
    %288 = vmatpush1.xpose.msra.mxu0 0.0
    %289 = vmatprep.subr.mxu0 0.0
    %290 = vmatpush1.xpose.msra.mxu0 0.0
    %291 = vmatprep.subr.mxu0 0.0
    %292 = vmatpush1.xpose.msra.mxu0 0.0
    %293 = vmatprep.mubr.f32.mxu0 0.0
    %294 = vmatmul.mubr.f32.gmra.mrb[0].mxu0 %v228
    %v295 = vpop.f32.mrb[0].mxu0
    %v296 = vadd.f32 0.0, %v295
    %v297 = vpop.f32.mrb[0].mxu0
    %298 = vdwg.mxu0
    %s299 = sld [smem:[#allocation2]]
    %v300 = vstv %s299
    %v301 = vadd.f32 %v296, %v300
    %vm302 = vcmask 57344
    %303 = vst.msk [vmem:[%s7] sm:$0x1] %vm302, %v301
    // Predicated region
    $region42: #{maddpg_critic_forward.1} parent=1 // pred_check
      _
    $region43: #{maddpg_critic_forward.1} parent=1 // pred_check_branch
      %305 = sbr.rel (0) target = $region45
    $region44: #{maddpg_critic_forward.1} parent=1 // pred_region
      _
    $region45: #{maddpg_critic_forward.1} parent=1 // pred_fallthru
      _
    // Predicated region
    $region46: #{maddpg_critic_forward.1} parent=1 // pred_check
      _
    $region47: #{maddpg_critic_forward.1} parent=1 // pred_check_branch
      %307 = sbr.rel (0) target = $region49
    $region48: #{maddpg_critic_forward.1} parent=1 // pred_region
      _
    $region49: #{maddpg_critic_forward.1} parent=1 // pred_fallthru
      _
    %308 = vsyncpa [#allocation4], 1
    %309 = vsyncpa [#allocation6], 1

</llo_original>
